<compile_context>
chip_gen: v5e
topology: v5e:2x2
jax: 0.10.0
libtpu: 0.0.40
codegen_flags: <defaults>
</compile_context>

<pallas_src>
import numpy as np
import jax
import jax.numpy as jnp
from jax.experimental import pallas as pl
from jax.experimental.pallas import tpu as pltpu

NEG_SLOPE = 0.01  # F.leaky_relu default negative_slope


def _leaky_relu(y):
    return jnp.where(y > 0, y, NEG_SLOPE * y)


# ----------------------------- fused kernel --------------------------------

def _make_fused_kernel(n_hidden_layers):
    """All 8 block-diagonalized branch MLPs + sum-reduce into state_pres +
    the final fc head, in one body.  Everything stays resident in vregs."""

    def kernel(x_ref, act_ref, w_hid_ref, b_hid_ref, w_last_ref, b_last_ref,
               w_sp_ref, w_act_ref, b_head_ref, o_ref):
        h = x_ref[...]                                            # [B, nb*S]
        # hidden layers: block-diagonal [nb*S, nb*S] matmuls (static unroll)
        for l in range(n_hidden_layers):
            y = jnp.dot(h, w_hid_ref[l], preferred_element_type=jnp.float32)
            y = y + b_hid_ref[l]                                  # [1, nb*S] broadcast
            h = _leaky_relu(y)                                    # FCBody gates every layer
        # final 1-dim presentation per branch: block-diag [nb*S, nb]
        y = jnp.dot(h, w_last_ref[...], preferred_element_type=jnp.float32)
        pres = _leaky_relu(y + b_last_ref[...])                   # [B, nb]
        # state_pres = l_img_pres + r_img_pres + ... (one lane reduce)
        state_pres = jnp.sum(pres, axis=-1, keepdims=True)        # [B, 1]
        # fc(cat([state_pres, action], -1)) = sp @ W_sp + action @ W_act + b
        out = state_pres * w_sp_ref[...]                          # VPU outer product [B, N]
        out = out + jnp.dot(act_ref[...], w_act_ref[...],
                            preferred_element_type=jnp.float32)
        o_ref[...] = out + b_head_ref[...]

    return kernel


def volumetric_value_net_fused(x_packed, action, w_hid, b_hid, w_last, b_last,
                               w_sp, w_act, b_head):
    B = x_packed.shape[0]
    N = w_sp.shape[1]
    vmem = pl.BlockSpec(memory_space=pltpu.MemorySpace.VMEM)
    return pl.pallas_call(
        _make_fused_kernel(int(w_hid.shape[0])),
        out_shape=jax.ShapeDtypeStruct((B, N), jnp.float32),
        in_specs=[vmem] * 9,
        out_specs=vmem,
    )(x_packed, action, w_hid, b_hid, w_last, b_last, w_sp, w_act, b_head)


def forward(packed_params, branch_inputs, action, slot):
    """Zero-pad each branch input to `slot` lanes, concat -> [B, nb*slot],
    then run the single fused kernel."""
    padded = [jnp.pad(x, ((0, 0), (0, slot - x.shape[1]))) for x in branch_inputs]
    x_packed = jnp.concatenate(padded, axis=-1)
    return volumetric_value_net_fused(x_packed, action, *packed_params)


# ------------------------------ parameters ---------------------------------

def _orthogonal(rng, rows, cols, scale=1.0):
    """Deterministic stand-in for nn.init.orthogonal_ (weight layout [out, in])."""
    a = rng.standard_normal((rows, cols))
    if rows < cols:
        a = a.T
    q, r = np.linalg.qr(a)
    q = q * np.sign(np.diag(r))
    if rows < cols:
        q = q.T
    return (scale * q).astype(np.float32)


def init_fcbody(rng, dims):
    """FCBody(dims[0], dims[1:]): orthogonal weights, zero bias.
    Returns [(W[in,out], b[out]), ...] as numpy."""
    layers = []
    for din, dout in zip(dims[:-1], dims[1:]):
        w_torch = _orthogonal(rng, dout, din)          # PyTorch Linear weight [out, in]
        layers.append((np.ascontiguousarray(w_torch.T), np.zeros((dout,), np.float32)))
    return layers


def pack_branch_params(branch_param_list, slot):
    """Pack per-branch FCBody params into block-diagonal slabs.
    Returns (W_hid[L, nb*slot, nb*slot], B_hid[L, 1, nb*slot],
             W_last[nb*slot, nb], B_last[1, nb])."""
    nb = len(branch_param_list)
    n_layers = len(branch_param_list[0])
    assert all(len(bp) == n_layers for bp in branch_param_list)
    n_hidden = n_layers - 1
    W_hid = np.zeros((n_hidden, nb * slot, nb * slot), np.float32)
    B_hid = np.zeros((n_hidden, 1, nb * slot), np.float32)
    W_last = np.zeros((nb * slot, nb), np.float32)
    B_last = np.zeros((1, nb), np.float32)
    for b, layers in enumerate(branch_param_list):
        for l in range(n_hidden):
            w, bias = layers[l]                        # w: [din, dout]
            din, dout = w.shape
            assert din <= slot and dout <= slot
            W_hid[l, b * slot:b * slot + din, b * slot:b * slot + dout] = w
            B_hid[l, 0, b * slot:b * slot + dout] = bias
        w, bias = layers[-1]                           # w: [din, 1]
        din = w.shape[0]
        W_last[b * slot:b * slot + din, b] = w[:, 0]
        B_last[0, b] = bias[0]
    return (jnp.asarray(W_hid), jnp.asarray(B_hid),
            jnp.asarray(W_last), jnp.asarray(B_last))


# ------------------------------ pure-JAX ref --------------------------------

def reference_forward(branch_param_list, branch_inputs, fc_w, fc_b, action):
    hi = jax.lax.Precision.HIGHEST
    sp = 0.0
    for layers, x in zip(branch_param_list, branch_inputs):
        h = x
        for w, b in layers:
            y = jnp.dot(h, jnp.asarray(w), precision=hi) + jnp.asarray(b)
            h = jnp.where(y > 0, y, NEG_SLOPE * y)
        sp = sp + h
    z = jnp.concatenate([sp, action], axis=-1)
    return jnp.dot(z, jnp.asarray(fc_w), precision=hi) + jnp.asarray(fc_b)


# --------------------------------- main -------------------------------------

if __name__ == "__main__":
    # small synthetic config
    state_dim = 24
    action_dim = 8
    img_FC_hidden_units = (32, 32)
    state_presentation_dim = 1        # output dim of FCBody(..., hidden + (1,))
    N = 4
    pose_dim = 7
    B = 8

    branch_in = state_dim + action_dim
    img_dims = (branch_in,) + img_FC_hidden_units + (state_presentation_dim,)
    pose_dims = (pose_dim,) + img_FC_hidden_units + (state_presentation_dim,)
    slot = max(branch_in, pose_dim, *img_FC_hidden_units)   # 32 -> 8*32 = 256 lanes

    rng = np.random.default_rng(0)
    # defined in __init__: self.fc_l_img
    # TODO(synk): fc_r_img / fc_depth / fc_segm / fc_voxel_removed / fc_voxel_color and all
    # *_body submodules are used in forward() but never defined in __init__; the bodies are
    # treated as identity and the missing heads mirror fc_l_img's FCBody architecture with
    # distinct deterministic weights.
    branch_params = [
        init_fcbody(rng, img_dims),   # l_img
        init_fcbody(rng, img_dims),   # r_img
        init_fcbody(rng, img_dims),   # depth
        init_fcbody(rng, img_dims),   # segm
        init_fcbody(rng, img_dims),   # voxel_removed
        init_fcbody(rng, img_dims),   # voxel_color
        init_fcbody(rng, pose_dims),  # pose_cam
        init_fcbody(rng, pose_dims),  # pose_drill
    ]
    # defined in __init__: self.fc = nn.Linear(state_presentation_dim + action_dim, N)
    fc_w = np.ascontiguousarray(
        _orthogonal(rng, N, state_presentation_dim + action_dim).T)   # [1+A, N]
    fc_b = np.zeros((1, N), np.float32)

    # host-side packing (done once)
    W_hid, B_hid, W_last, B_last = pack_branch_params(branch_params, slot)
    w_sp = jnp.asarray(fc_w[:state_presentation_dim])   # [1, N]
    w_act = jnp.asarray(fc_w[state_presentation_dim:])  # [A, N]
    b_head = jnp.asarray(fc_b)                          # [1, N]
    packed_params = (W_hid, B_hid, W_last, B_last, w_sp, w_act, b_head)

    # inputs
    key = jax.random.PRNGKey(0)
    ks = jax.random.split(key, 9)
    l_img = jax.random.normal(ks[0], (B, branch_in), jnp.float32)
    r_img = jax.random.normal(ks[1], (B, branch_in), jnp.float32)
    depth = jax.random.normal(ks[2], (B, branch_in), jnp.float32)
    segm = jax.random.normal(ks[3], (B, branch_in), jnp.float32)
    voxel_removed = jax.random.normal(ks[4], (B, branch_in), jnp.float32)
    voxel_color = jax.random.normal(ks[5], (B, branch_in), jnp.float32)
    pose_cam = jax.random.normal(ks[6], (B, pose_dim), jnp.float32)
    pose_drill = jax.random.normal(ks[7], (B, pose_dim), jnp.float32)
    action = jax.random.normal(ks[8], (B, action_dim), jnp.float32)

    branch_inputs = (l_img, r_img, depth, segm, voxel_removed, voxel_color,
                     pose_cam, pose_drill)

    fwd = jax.jit(lambda pp, bi, act: forward(pp, bi, act, slot))
    out = fwd(packed_params, branch_inputs, action)
    jax.block_until_ready(out)
    assert out.shape == (B, N) and out.dtype == jnp.float32

    # correctness vs. pure-JAX reference (loose tol for MXU f32 decomposition)
    ref = reference_forward(branch_params, branch_inputs, fc_w, fc_b, action)
    np.testing.assert_allclose(np.asarray(out), np.asarray(ref), rtol=1e-2, atol=1e-2)

    print("KERNEL_OK")
</pallas_src>

<mosaic_0001>
module attributes {stable_mosaic.version = 11 : i64} {
  func.func @kernel(%arg0: memref<8x256xf32, #tpu.memory_space<vmem>>, %arg1: memref<8x8xf32, #tpu.memory_space<vmem>>, %arg2: memref<2x256x256xf32, #tpu.memory_space<vmem>>, %arg3: memref<2x1x256xf32, #tpu.memory_space<vmem>>, %arg4: memref<256x8xf32, #tpu.memory_space<vmem>>, %arg5: memref<1x8xf32, #tpu.memory_space<vmem>>, %arg6: memref<1x4xf32, #tpu.memory_space<vmem>>, %arg7: memref<8x4xf32, #tpu.memory_space<vmem>>, %arg8: memref<1x4xf32, #tpu.memory_space<vmem>>, %arg9: memref<8x4xf32, #tpu.memory_space<vmem>>) attributes {dimension_semantics = [], scalar_prefetch = 0 : i64, scratch_operands = 0 : i64, tpu.core_type = #tpu.core_type<tc>} {
    %c0 = arith.constant 0 : index
    %c0_0 = arith.constant 0 : index
    %0 = vector.load %arg0[%c0, %c0_0] : memref<8x256xf32, #tpu.memory_space<vmem>>, vector<8x256xf32>
    %c0_1 = arith.constant 0 : index
    %c0_2 = arith.constant 0 : index
    %c0_3 = arith.constant 0 : index
    %1 = vector.load %arg2[%c0_1, %c0_2, %c0_3] : memref<2x256x256xf32, #tpu.memory_space<vmem>>, vector<1x256x256xf32>
    %2 = vector.shape_cast %1 : vector<1x256x256xf32> to vector<256x256xf32>
    %cst = arith.constant dense<0.000000e+00> : vector<8x256xf32>
    %3 = tpu.matmul %0, %2, %cst {dimension_numbers = #tpu.dot_dimension_numbers<[1], [0], [0], [1], [0, 0, 1, 1], [], []>} : vector<8x256xf32>, vector<256x256xf32>, vector<8x256xf32> -> vector<8x256xf32>
    %c0_4 = arith.constant 0 : index
    %c0_5 = arith.constant 0 : index
    %c0_6 = arith.constant 0 : index
    %4 = vector.load %arg3[%c0_4, %c0_5, %c0_6] : memref<2x1x256xf32, #tpu.memory_space<vmem>>, vector<1x1x256xf32>
    %5 = vector.shape_cast %4 : vector<1x1x256xf32> to vector<1x256xf32>
    %6 = vector.broadcast %5 : vector<1x256xf32> to vector<8x256xf32>
    %7 = arith.addf %3, %6 : vector<8x256xf32>
    %cst_7 = arith.constant 0.000000e+00 : f32
    %8 = vector.broadcast %cst_7 : f32 to vector<8x256xf32>
    %9 = arith.cmpf ogt, %7, %8 : vector<8x256xf32>
    %cst_8 = arith.constant 0.00999999977 : f32
    %10 = vector.broadcast %cst_8 : f32 to vector<8x256xf32>
    %11 = arith.mulf %10, %7 : vector<8x256xf32>
    %12 = arith.select %9, %7, %11 : vector<8x256xi1>, vector<8x256xf32>
    %c1 = arith.constant 1 : index
    %c0_9 = arith.constant 0 : index
    %c0_10 = arith.constant 0 : index
    %13 = vector.load %arg2[%c1, %c0_9, %c0_10] : memref<2x256x256xf32, #tpu.memory_space<vmem>>, vector<1x256x256xf32>
    %14 = vector.shape_cast %13 : vector<1x256x256xf32> to vector<256x256xf32>
    %cst_11 = arith.constant dense<0.000000e+00> : vector<8x256xf32>
    %15 = tpu.matmul %12, %14, %cst_11 {dimension_numbers = #tpu.dot_dimension_numbers<[1], [0], [0], [1], [0, 0, 1, 1], [], []>} : vector<8x256xf32>, vector<256x256xf32>, vector<8x256xf32> -> vector<8x256xf32>
    %c1_12 = arith.constant 1 : index
    %c0_13 = arith.constant 0 : index
    %c0_14 = arith.constant 0 : index
    %16 = vector.load %arg3[%c1_12, %c0_13, %c0_14] : memref<2x1x256xf32, #tpu.memory_space<vmem>>, vector<1x1x256xf32>
    %17 = vector.shape_cast %16 : vector<1x1x256xf32> to vector<1x256xf32>
    %18 = vector.broadcast %17 : vector<1x256xf32> to vector<8x256xf32>
    %19 = arith.addf %15, %18 : vector<8x256xf32>
    %cst_15 = arith.constant 0.000000e+00 : f32
    %20 = vector.broadcast %cst_15 : f32 to vector<8x256xf32>
    %21 = arith.cmpf ogt, %19, %20 : vector<8x256xf32>
    %cst_16 = arith.constant 0.00999999977 : f32
    %22 = vector.broadcast %cst_16 : f32 to vector<8x256xf32>
    %23 = arith.mulf %22, %19 : vector<8x256xf32>
    %24 = arith.select %21, %19, %23 : vector<8x256xi1>, vector<8x256xf32>
    %c0_17 = arith.constant 0 : index
    %c0_18 = arith.constant 0 : index
    %25 = vector.load %arg4[%c0_17, %c0_18] : memref<256x8xf32, #tpu.memory_space<vmem>>, vector<256x8xf32>
    %cst_19 = arith.constant dense<0.000000e+00> : vector<8x8xf32>
    %26 = tpu.matmul %24, %25, %cst_19 {dimension_numbers = #tpu.dot_dimension_numbers<[1], [0], [0], [1], [0, 0, 1, 1], [], []>} : vector<8x256xf32>, vector<256x8xf32>, vector<8x8xf32> -> vector<8x8xf32>
    %c0_20 = arith.constant 0 : index
    %c0_21 = arith.constant 0 : index
    %27 = vector.load %arg5[%c0_20, %c0_21] : memref<1x8xf32, #tpu.memory_space<vmem>>, vector<1x8xf32>
    %28 = vector.broadcast %27 : vector<1x8xf32> to vector<8x8xf32>
    %29 = arith.addf %26, %28 : vector<8x8xf32>
    %cst_22 = arith.constant 0.000000e+00 : f32
    %30 = vector.broadcast %cst_22 : f32 to vector<8x8xf32>
    %31 = arith.cmpf ogt, %29, %30 : vector<8x8xf32>
    %cst_23 = arith.constant 0.00999999977 : f32
    %32 = vector.broadcast %cst_23 : f32 to vector<8x8xf32>
    %33 = arith.mulf %32, %29 : vector<8x8xf32>
    %34 = arith.select %31, %29, %33 : vector<8x8xi1>, vector<8x8xf32>
    %cst_24 = arith.constant dense<0.000000e+00> : vector<8xf32>
    %35 = vector.multi_reduction <add>, %34, %cst_24 [1] : vector<8x8xf32> to vector<8xf32>
    %36 = vector.shape_cast %35 : vector<8xf32> to vector<8x1xf32>
    %c0_25 = arith.constant 0 : index
    %c0_26 = arith.constant 0 : index
    %37 = vector.load %arg6[%c0_25, %c0_26] : memref<1x4xf32, #tpu.memory_space<vmem>>, vector<1x4xf32>
    %38 = vector.broadcast %36 : vector<8x1xf32> to vector<8x4xf32>
    %39 = vector.broadcast %37 : vector<1x4xf32> to vector<8x4xf32>
    %40 = arith.mulf %38, %39 : vector<8x4xf32>
    %c0_27 = arith.constant 0 : index
    %c0_28 = arith.constant 0 : index
    %41 = vector.load %arg1[%c0_27, %c0_28] : memref<8x8xf32, #tpu.memory_space<vmem>>, vector<8x8xf32>
    %c0_29 = arith.constant 0 : index
    %c0_30 = arith.constant 0 : index
    %42 = vector.load %arg7[%c0_29, %c0_30] : memref<8x4xf32, #tpu.memory_space<vmem>>, vector<8x4xf32>
    %cst_31 = arith.constant dense<0.000000e+00> : vector<8x4xf32>
    %43 = tpu.matmul %41, %42, %cst_31 {dimension_numbers = #tpu.dot_dimension_numbers<[1], [0], [0], [1], [0, 0, 1, 1], [], []>} : vector<8x8xf32>, vector<8x4xf32>, vector<8x4xf32> -> vector<8x4xf32>
    %44 = arith.addf %40, %43 : vector<8x4xf32>
    %c0_32 = arith.constant 0 : index
    %c0_33 = arith.constant 0 : index
    %45 = vector.load %arg8[%c0_32, %c0_33] : memref<1x4xf32, #tpu.memory_space<vmem>>, vector<1x4xf32>
    %46 = vector.broadcast %45 : vector<1x4xf32> to vector<8x4xf32>
    %47 = arith.addf %44, %46 : vector<8x4xf32>
    %c0_34 = arith.constant 0 : index
    %c0_35 = arith.constant 0 : index
    %48 = vector.load %arg9[%c0_34, %c0_35] : memref<8x4xf32, #tpu.memory_space<vmem>>, vector<8x4xf32>
    tpu.vector_store %arg9[%c0_34, %c0_35], %47 {strides = array<i32>} : memref<8x4xf32, #tpu.memory_space<vmem>>, vector<8x4xf32>,
    return
  }
}

</mosaic_0001>

<llo_original>
// kernel: _lambda_.1
$region0: #{_lambda_.1}
  #allocation0 [shape = 'u32[]', space=smem, size = 0x4, offset = 0x4, fixed_abs, tag = 'smem constant byte address 0x4 - core index']
  #allocation1 [shape = 'u32[72,128]{1,0:T(1,128)}', space=vmem, size = 0x9000, scoped, tag = 'internal scratch']
  %s0 = inlined_call_operand.vmem [shape: f32[8,256], index: 0, kind: input, shape index: {}]
  %s1 = inlined_call_operand.vmem [shape: f32[8,8], index: 1, kind: input, shape index: {}]
  %s2 = inlined_call_operand.hbm [shape: f32[2,256,256], index: 2, kind: input, shape index: {}]
  %s3 = inlined_call_operand.vmem [shape: f32[2,1,256], index: 3, kind: input, shape index: {}]
  %s4 = inlined_call_operand.vmem [shape: f32[256,8], index: 4, kind: input, shape index: {}]
  %s5 = inlined_call_operand.vmem [shape: f32[1,8], index: 5, kind: input, shape index: {}]
  %s6 = inlined_call_operand.vmem [shape: f32[1,4], index: 6, kind: input, shape index: {}]
  %s7 = inlined_call_operand.vmem [shape: f32[8,4], index: 7, kind: input, shape index: {}]
  %s8 = inlined_call_operand.vmem [shape: f32[1,4], index: 8, kind: input, shape index: {}]
  %s9 = inlined_call_operand.vmem [shape: f32[8,4], index: 9, kind: output, shape index: {}]
  %s10 = sld [smem:[#allocation0]]
  $region50: #{_lambda_.1} parent=0
    _
  %s12 = ssub.s32 1, %s10
  %s13 = scalar_select 0, %s12, %s10
  $region1: #{_lambda_.1} parent=0
    #allocation2 [shape = 'u8[524288]{0}', space=vmem, size = 0x80000, scoped, tag = 'input window, operand 2, single buffered']
    #allocation3 [shape = 's32[1]{0}', space=sflag, size = 0x4, scoped, tag = 'scoped memory for _lambda_.1']
    %14 = vsyncpa [#allocation3], 0
    // Predicated region
    $region2: #{_lambda_.1} parent=1 // pred_check
      _
    $region3: #{_lambda_.1} parent=1 // pred_check_branch
      %16 = sbr.rel (0) target = $region5
    $region4: #{_lambda_.1} parent=1 // pred_region
      _
    $region5: #{_lambda_.1} parent=1 // pred_fallthru
      _
    // Predicated region
    $region6: #{_lambda_.1} parent=1 // pred_check
      _
    $region7: #{_lambda_.1} parent=1 // pred_check_branch
      %18 = sbr.rel (0) target = $region9
    $region8: #{_lambda_.1} parent=1 // pred_region
      _
    $region9: #{_lambda_.1} parent=1 // pred_fallthru
      _
    // Predicated region
    $region10: #{_lambda_.1} parent=1 // pred_check
      _
    $region11: #{_lambda_.1} parent=1 // pred_check_branch
      %20 = sbr.rel (0) target = $region13
    $region12: #{_lambda_.1} parent=1 // pred_region
      %22 = vsyncadd [#allocation3], 0
      %s23 = sshll.u32 %s2, 4
      %s24 = int_to_ptr.hbm [resolvable:$true] %s23
      %s25 = sshll.u32 [#allocation2], 4
      %s26 = int_to_ptr.vmem [resolvable:$true] %s25
      %31 = dma.hbm_to_vmem [thread:$0]  %s24, 16384, %s26, [#allocation3], 256, 256, 16
    $region13: #{_lambda_.1} parent=1 // pred_fallthru
      _
    // Predicated region
    $region14: #{_lambda_.1} parent=1 // pred_check
      _
    $region15: #{_lambda_.1} parent=1 // pred_check_branch
      %33 = sbr.rel (0) target = $region17
    $region16: #{_lambda_.1} parent=1 // pred_region
      _
    $region17: #{_lambda_.1} parent=1 // pred_fallthru
      _
    // Predicated region
    $region18: #{_lambda_.1} parent=1 // pred_check
      _
    $region19: #{_lambda_.1} parent=1 // pred_check_branch
      %35 = sbr.rel (0) target = $region21
    $region20: #{_lambda_.1} parent=1 // pred_region
      _
    $region21: #{_lambda_.1} parent=1 // pred_fallthru
      _
    // Predicated region
    $region22: #{_lambda_.1} parent=1 // pred_check
      _
    $region23: #{_lambda_.1} parent=1 // pred_check_branch
      %37 = sbr.rel (0) target = $region25
    $region24: #{_lambda_.1} parent=1 // pred_region
      _
    $region25: #{_lambda_.1} parent=1 // pred_fallthru
      _
    // Predicated region
    $region26: #{_lambda_.1} parent=1 // pred_check
      _
    $region27: #{_lambda_.1} parent=1 // pred_check_branch
      %39 = sbr.rel (0) target = $region29
    $region28: #{_lambda_.1} parent=1 // pred_region
      _
    $region29: #{_lambda_.1} parent=1 // pred_fallthru
      _
    // Predicated region
    $region30: #{_lambda_.1} parent=1 // pred_check
      _
    $region31: #{_lambda_.1} parent=1 // pred_check_branch
      %41 = sbr.rel (0) target = $region33
    $region32: #{_lambda_.1} parent=1 // pred_region
      _
    $region33: #{_lambda_.1} parent=1 // pred_fallthru
      _
    // Predicated region
    $region34: #{_lambda_.1} parent=1 // pred_check
      _
    $region35: #{_lambda_.1} parent=1 // pred_check_branch
      %43 = sbr.rel (0) target = $region37
    $region36: #{_lambda_.1} parent=1 // pred_region
      _
    $region37: #{_lambda_.1} parent=1 // pred_fallthru
      _
    // Predicated region
    $region38: #{_lambda_.1} parent=1 // pred_check
      _
    $region39: #{_lambda_.1} parent=1 // pred_check_branch
      %45 = sbr.rel (0) target = $region41
    $region40: #{_lambda_.1} parent=1 // pred_region
      %47 = dma.done [#allocation3], 16384
    $region41: #{_lambda_.1} parent=1 // pred_fallthru
      _
    %v48 = vld [vmem:[%s0] sm:$0xff]
    %v49 = vld [vmem:[%s0 + $0x8] sm:$0xff]
    %v50 = vld [vmem:[#allocation2] sm:$0xff]
    %v51 = vld [vmem:[#allocation2 + $0x8] sm:$0xff]
    %v52 = vld [vmem:[#allocation2 + $0x10] sm:$0xff]
    %v53 = vld [vmem:[#allocation2 + $0x18] sm:$0xff]
    %v54 = vld [vmem:[#allocation2 + $0x20] sm:$0xff]
    %v55 = vld [vmem:[#allocation2 + $0x28] sm:$0xff]
    %v56 = vld [vmem:[#allocation2 + $0x30] sm:$0xff]
    %v57 = vld [vmem:[#allocation2 + $0x38] sm:$0xff]
    %v58 = vld [vmem:[#allocation2 + $0x40] sm:$0xff]
    %v59 = vld [vmem:[#allocation2 + $0x48] sm:$0xff]
    %v60 = vld [vmem:[#allocation2 + $0x50] sm:$0xff]
    %v61 = vld [vmem:[#allocation2 + $0x58] sm:$0xff]
    %v62 = vld [vmem:[#allocation2 + $0x60] sm:$0xff]
    %v63 = vld [vmem:[#allocation2 + $0x68] sm:$0xff]
    %v64 = vld [vmem:[#allocation2 + $0x70] sm:$0xff]
    %v65 = vld [vmem:[#allocation2 + $0x78] sm:$0xff]
    %v66 = vld [vmem:[#allocation2 + $0x80] sm:$0xff]
    %v67 = vld [vmem:[#allocation2 + $0x88] sm:$0xff]
    %v68 = vld [vmem:[#allocation2 + $0x90] sm:$0xff]
    %v69 = vld [vmem:[#allocation2 + $0x98] sm:$0xff]
    %v70 = vld [vmem:[#allocation2 + $0xa0] sm:$0xff]
    %v71 = vld [vmem:[#allocation2 + $0xa8] sm:$0xff]
    %v72 = vld [vmem:[#allocation2 + $0xb0] sm:$0xff]
    %v73 = vld [vmem:[#allocation2 + $0xb8] sm:$0xff]
    %v74 = vld [vmem:[#allocation2 + $0xc0] sm:$0xff]
    %v75 = vld [vmem:[#allocation2 + $0xc8] sm:$0xff]
    %v76 = vld [vmem:[#allocation2 + $0xd0] sm:$0xff]
    %v77 = vld [vmem:[#allocation2 + $0xd8] sm:$0xff]
    %v78 = vld [vmem:[#allocation2 + $0xe0] sm:$0xff]
    %v79 = vld [vmem:[#allocation2 + $0xe8] sm:$0xff]
    %v80 = vld [vmem:[#allocation2 + $0xf0] sm:$0xff]
    %v81 = vld [vmem:[#allocation2 + $0xf8] sm:$0xff]
    %v82 = vld [vmem:[#allocation2 + $0x100] sm:$0xff]
    %v83 = vld [vmem:[#allocation2 + $0x108] sm:$0xff]
    %v84 = vld [vmem:[#allocation2 + $0x110] sm:$0xff]
    %v85 = vld [vmem:[#allocation2 + $0x118] sm:$0xff]
    %v86 = vld [vmem:[#allocation2 + $0x120] sm:$0xff]
    %v87 = vld [vmem:[#allocation2 + $0x128] sm:$0xff]
    %v88 = vld [vmem:[#allocation2 + $0x130] sm:$0xff]
    %v89 = vld [vmem:[#allocation2 + $0x138] sm:$0xff]
    %v90 = vld [vmem:[#allocation2 + $0x140] sm:$0xff]
    %v91 = vld [vmem:[#allocation2 + $0x148] sm:$0xff]
    %v92 = vld [vmem:[#allocation2 + $0x150] sm:$0xff]
    %v93 = vld [vmem:[#allocation2 + $0x158] sm:$0xff]
    %v94 = vld [vmem:[#allocation2 + $0x160] sm:$0xff]
    %v95 = vld [vmem:[#allocation2 + $0x168] sm:$0xff]
    %v96 = vld [vmem:[#allocation2 + $0x170] sm:$0xff]
    %v97 = vld [vmem:[#allocation2 + $0x178] sm:$0xff]
    %v98 = vld [vmem:[#allocation2 + $0x180] sm:$0xff]
    %v99 = vld [vmem:[#allocation2 + $0x188] sm:$0xff]
    %v100 = vld [vmem:[#allocation2 + $0x190] sm:$0xff]
    %v101 = vld [vmem:[#allocation2 + $0x198] sm:$0xff]
    %v102 = vld [vmem:[#allocation2 + $0x1a0] sm:$0xff]
    %v103 = vld [vmem:[#allocation2 + $0x1a8] sm:$0xff]
    %v104 = vld [vmem:[#allocation2 + $0x1b0] sm:$0xff]
    %v105 = vld [vmem:[#allocation2 + $0x1b8] sm:$0xff]
    %v106 = vld [vmem:[#allocation2 + $0x1c0] sm:$0xff]
    %v107 = vld [vmem:[#allocation2 + $0x1c8] sm:$0xff]
    %v108 = vld [vmem:[#allocation2 + $0x1d0] sm:$0xff]
    %v109 = vld [vmem:[#allocation2 + $0x1d8] sm:$0xff]
    %v110 = vld [vmem:[#allocation2 + $0x1e0] sm:$0xff]
    %v111 = vld [vmem:[#allocation2 + $0x1e8] sm:$0xff]
    %v112 = vld [vmem:[#allocation2 + $0x1f0] sm:$0xff]
    %v113 = vld [vmem:[#allocation2 + $0x1f8] sm:$0xff]
    %v114 = vld [vmem:[%s3] sm:$0x3]
    %v116 = vperm.slane %v114, 0
    %v117 = vperm.slane %v114, 1
    %120 = vmatpush.msra.mxu0 %v80
    %121 = vmatpush.msra.mxu0 %v78
    %122 = vmatpush.msra.mxu0 %v76
    %123 = vmatpush.msra.mxu0 %v74
    %124 = vmatpush.msra.mxu0 %v72
    %125 = vmatpush.msra.mxu0 %v70
    %126 = vmatpush.msra.mxu0 %v68
    %127 = vmatpush.msra.mxu0 %v66
    %128 = vmatpush.msra.mxu0 %v64
    %129 = vmatpush.msra.mxu0 %v62
    %130 = vmatpush.msra.mxu0 %v60
    %131 = vmatpush.msra.mxu0 %v58
    %132 = vmatpush.msra.mxu0 %v56
    %133 = vmatpush.msra.mxu0 %v54
    %134 = vmatpush.msra.mxu0 %v52
    %135 = vmatpush.msra.mxu0 %v50
    %136 = vmatmul.f32.gmra.mxu0 %v48
    %v137 = vpop.f32.mrf.mxu0
    %v138 = vadd.f32 %v116, %v137
    %139 = vdwg.mxu0
    %140 = vmatpush.msra.mxu0 %v112
    %141 = vmatpush.msra.mxu0 %v110
    %142 = vmatpush.msra.mxu0 %v108
    %143 = vmatpush.msra.mxu0 %v106
    %144 = vmatpush.msra.mxu0 %v104
    %145 = vmatpush.msra.mxu0 %v102
    %146 = vmatpush.msra.mxu0 %v100
    %147 = vmatpush.msra.mxu0 %v98
    %148 = vmatpush.msra.mxu0 %v96
    %149 = vmatpush.msra.mxu0 %v94
    %150 = vmatpush.msra.mxu0 %v92
    %151 = vmatpush.msra.mxu0 %v90
    %152 = vmatpush.msra.mxu0 %v88
    %153 = vmatpush.msra.mxu0 %v86
    %154 = vmatpush.msra.mxu0 %v84
    %155 = vmatpush.msra.mxu0 %v82
    %156 = vmatmul.f32.gmra.mxu0 %v49
    %v157 = vpop.f32.mrf.mxu0
    %v158 = vadd.f32 %v138, %v157
    %159 = vdwg.mxu0
    %160 = vmatpush.msra.mxu0 %v81
    %161 = vmatpush.msra.mxu0 %v79
    %162 = vmatpush.msra.mxu0 %v77
    %163 = vmatpush.msra.mxu0 %v75
    %164 = vmatpush.msra.mxu0 %v73
    %165 = vmatpush.msra.mxu0 %v71
    %166 = vmatpush.msra.mxu0 %v69
    %167 = vmatpush.msra.mxu0 %v67
    %168 = vmatpush.msra.mxu0 %v65
    %169 = vmatpush.msra.mxu0 %v63
    %170 = vmatpush.msra.mxu0 %v61
    %171 = vmatpush.msra.mxu0 %v59
    %172 = vmatpush.msra.mxu0 %v57
    %173 = vmatpush.msra.mxu0 %v55
    %174 = vmatpush.msra.mxu0 %v53
    %175 = vmatpush.msra.mxu0 %v51
    %176 = vmatmul.f32.gmra.mxu0 %v48
    %v177 = vpop.f32.mrf.mxu0
    %v178 = vadd.f32 %v117, %v177
    %179 = vdwg.mxu0
    %180 = vmatpush.msra.mxu0 %v113
    %181 = vmatpush.msra.mxu0 %v111
    %182 = vmatpush.msra.mxu0 %v109
    %183 = vmatpush.msra.mxu0 %v107
    %184 = vmatpush.msra.mxu0 %v105
    %185 = vmatpush.msra.mxu0 %v103
    %186 = vmatpush.msra.mxu0 %v101
    %187 = vmatpush.msra.mxu0 %v99
    %188 = vmatpush.msra.mxu0 %v97
    %189 = vmatpush.msra.mxu0 %v95
    %190 = vmatpush.msra.mxu0 %v93
    %191 = vmatpush.msra.mxu0 %v91
    %192 = vmatpush.msra.mxu0 %v89
    %193 = vmatpush.msra.mxu0 %v87
    %194 = vmatpush.msra.mxu0 %v85
    %195 = vmatpush.msra.mxu0 %v83
    %196 = vmatmul.f32.gmra.mxu0 %v49
    %v197 = vpop.f32.mrf.mxu0
    %v198 = vadd.f32 %v178, %v197
    %199 = vdwg.mxu0
    %vm200 = vcmp.gt.f32.partialorder %v158, 0.0
    %vm201 = vcmp.gt.f32.partialorder %v198, 0.0
    %v202 = vmul.f32 %v158, 0.01
    %v203 = vmul.f32 %v198, 0.01
    %v204 = vsel %vm200, %v158, %v202
    %v205 = vsel %vm201, %v198, %v203
    %s206 = scalar_lea.vmem [#allocation2], 512
    %v207 = vld [vmem:[%s206] sm:$0xff]
    %v208 = vld [vmem:[%s206 + $0x8] sm:$0xff]
    %v209 = vld [vmem:[%s206 + $0x10] sm:$0xff]
    %v210 = vld [vmem:[%s206 + $0x18] sm:$0xff]
    %v211 = vld [vmem:[%s206 + $0x20] sm:$0xff]
    %v212 = vld [vmem:[%s206 + $0x28] sm:$0xff]
    %v213 = vld [vmem:[%s206 + $0x30] sm:$0xff]
    %v214 = vld [vmem:[%s206 + $0x38] sm:$0xff]
    %v215 = vld [vmem:[%s206 + $0x40] sm:$0xff]
    %v216 = vld [vmem:[%s206 + $0x48] sm:$0xff]
    %v217 = vld [vmem:[%s206 + $0x50] sm:$0xff]
    %v218 = vld [vmem:[%s206 + $0x58] sm:$0xff]
    %v219 = vld [vmem:[%s206 + $0x60] sm:$0xff]
    %v220 = vld [vmem:[%s206 + $0x68] sm:$0xff]
    %v221 = vld [vmem:[%s206 + $0x70] sm:$0xff]
    %v222 = vld [vmem:[%s206 + $0x78] sm:$0xff]
    %v223 = vld [vmem:[%s206 + $0x80] sm:$0xff]
    %v224 = vld [vmem:[%s206 + $0x88] sm:$0xff]
    %v225 = vld [vmem:[%s206 + $0x90] sm:$0xff]
    %v226 = vld [vmem:[%s206 + $0x98] sm:$0xff]
    %v227 = vld [vmem:[%s206 + $0xa0] sm:$0xff]
    %v228 = vld [vmem:[%s206 + $0xa8] sm:$0xff]
    %v229 = vld [vmem:[%s206 + $0xb0] sm:$0xff]
    %v230 = vld [vmem:[%s206 + $0xb8] sm:$0xff]
    %v231 = vld [vmem:[%s206 + $0xc0] sm:$0xff]
    %v232 = vld [vmem:[%s206 + $0xc8] sm:$0xff]
    %v233 = vld [vmem:[%s206 + $0xd0] sm:$0xff]
    %v234 = vld [vmem:[%s206 + $0xd8] sm:$0xff]
    %v235 = vld [vmem:[%s206 + $0xe0] sm:$0xff]
    %v236 = vld [vmem:[%s206 + $0xe8] sm:$0xff]
    %v237 = vld [vmem:[%s206 + $0xf0] sm:$0xff]
    %v238 = vld [vmem:[%s206 + $0xf8] sm:$0xff]
    %v239 = vld [vmem:[%s206 + $0x100] sm:$0xff]
    %v240 = vld [vmem:[%s206 + $0x108] sm:$0xff]
    %v241 = vld [vmem:[%s206 + $0x110] sm:$0xff]
    %v242 = vld [vmem:[%s206 + $0x118] sm:$0xff]
    %v243 = vld [vmem:[%s206 + $0x120] sm:$0xff]
    %v244 = vld [vmem:[%s206 + $0x128] sm:$0xff]
    %v245 = vld [vmem:[%s206 + $0x130] sm:$0xff]
    %v246 = vld [vmem:[%s206 + $0x138] sm:$0xff]
    %v247 = vld [vmem:[%s206 + $0x140] sm:$0xff]
    %v248 = vld [vmem:[%s206 + $0x148] sm:$0xff]
    %v249 = vld [vmem:[%s206 + $0x150] sm:$0xff]
    %v250 = vld [vmem:[%s206 + $0x158] sm:$0xff]
    %v251 = vld [vmem:[%s206 + $0x160] sm:$0xff]
    %v252 = vld [vmem:[%s206 + $0x168] sm:$0xff]
    %v253 = vld [vmem:[%s206 + $0x170] sm:$0xff]
    %v254 = vld [vmem:[%s206 + $0x178] sm:$0xff]
    %v255 = vld [vmem:[%s206 + $0x180] sm:$0xff]
    %v256 = vld [vmem:[%s206 + $0x188] sm:$0xff]
    %v257 = vld [vmem:[%s206 + $0x190] sm:$0xff]
    %v258 = vld [vmem:[%s206 + $0x198] sm:$0xff]
    %v259 = vld [vmem:[%s206 + $0x1a0] sm:$0xff]
    %v260 = vld [vmem:[%s206 + $0x1a8] sm:$0xff]
    %v261 = vld [vmem:[%s206 + $0x1b0] sm:$0xff]
    %v262 = vld [vmem:[%s206 + $0x1b8] sm:$0xff]
    %v263 = vld [vmem:[%s206 + $0x1c0] sm:$0xff]
    %v264 = vld [vmem:[%s206 + $0x1c8] sm:$0xff]
    %v265 = vld [vmem:[%s206 + $0x1d0] sm:$0xff]
    %v266 = vld [vmem:[%s206 + $0x1d8] sm:$0xff]
    %v267 = vld [vmem:[%s206 + $0x1e0] sm:$0xff]
    %v268 = vld [vmem:[%s206 + $0x1e8] sm:$0xff]
    %v269 = vld [vmem:[%s206 + $0x1f0] sm:$0xff]
    %v270 = vld [vmem:[%s206 + $0x1f8] sm:$0xff]
    %s271 = scalar_lea.vmem %s3, 2
    %v272 = vld [vmem:[%s271] sm:$0x3]
    %v274 = vperm.slane %v272, 0
    %v275 = vperm.slane %v272, 1
    %278 = vmatpush.msra.mxu0 %v237
    %279 = vmatpush.msra.mxu0 %v235
    %280 = vmatpush.msra.mxu0 %v233
    %281 = vmatpush.msra.mxu0 %v231
    %282 = vmatpush.msra.mxu0 %v229
    %283 = vmatpush.msra.mxu0 %v227
    %284 = vmatpush.msra.mxu0 %v225
    %285 = vmatpush.msra.mxu0 %v223
    %286 = vmatpush.msra.mxu0 %v221
    %287 = vmatpush.msra.mxu0 %v219
    %288 = vmatpush.msra.mxu0 %v217
    %289 = vmatpush.msra.mxu0 %v215
    %290 = vmatpush.msra.mxu0 %v213
    %291 = vmatpush.msra.mxu0 %v211
    %292 = vmatpush.msra.mxu0 %v209
    %293 = vmatpush.msra.mxu0 %v207
    %294 = vmatmul.f32.gmra.mxu0 %v204
    %v295 = vpop.f32.mrf.mxu0
    %v296 = vadd.f32 %v274, %v295
    %297 = vdwg.mxu0
    %298 = vmatpush.msra.mxu0 %v269
    %299 = vmatpush.msra.mxu0 %v267
    %300 = vmatpush.msra.mxu0 %v265
    %301 = vmatpush.msra.mxu0 %v263
    %302 = vmatpush.msra.mxu0 %v261
    %303 = vmatpush.msra.mxu0 %v259
    %304 = vmatpush.msra.mxu0 %v257
    %305 = vmatpush.msra.mxu0 %v255
    %306 = vmatpush.msra.mxu0 %v253
    %307 = vmatpush.msra.mxu0 %v251
    %308 = vmatpush.msra.mxu0 %v249
    %309 = vmatpush.msra.mxu0 %v247
    %310 = vmatpush.msra.mxu0 %v245
    %311 = vmatpush.msra.mxu0 %v243
    %312 = vmatpush.msra.mxu0 %v241
    %313 = vmatpush.msra.mxu0 %v239
    %314 = vmatmul.f32.gmra.mxu0 %v205
    %v315 = vpop.f32.mrf.mxu0
    %v316 = vadd.f32 %v296, %v315
    %317 = vdwg.mxu0
    %318 = vmatpush.msra.mxu0 %v238
    %319 = vmatpush.msra.mxu0 %v236
    %320 = vmatpush.msra.mxu0 %v234
    %321 = vmatpush.msra.mxu0 %v232
    %322 = vmatpush.msra.mxu0 %v230
    %323 = vmatpush.msra.mxu0 %v228
    %324 = vmatpush.msra.mxu0 %v226
    %325 = vmatpush.msra.mxu0 %v224
    %326 = vmatpush.msra.mxu0 %v222
    %327 = vmatpush.msra.mxu0 %v220
    %328 = vmatpush.msra.mxu0 %v218
    %329 = vmatpush.msra.mxu0 %v216
    %330 = vmatpush.msra.mxu0 %v214
    %331 = vmatpush.msra.mxu0 %v212
    %332 = vmatpush.msra.mxu0 %v210
    %333 = vmatpush.msra.mxu0 %v208
    %334 = vmatmul.f32.gmra.mxu0 %v204
    %v335 = vpop.f32.mrf.mxu0
    %v336 = vadd.f32 %v275, %v335
    %337 = vdwg.mxu0
    %338 = vmatpush.msra.mxu0 %v270
    %339 = vmatpush.msra.mxu0 %v268
    %340 = vmatpush.msra.mxu0 %v266
    %341 = vmatpush.msra.mxu0 %v264
    %342 = vmatpush.msra.mxu0 %v262
    %343 = vmatpush.msra.mxu0 %v260
    %344 = vmatpush.msra.mxu0 %v258
    %345 = vmatpush.msra.mxu0 %v256
    %346 = vmatpush.msra.mxu0 %v254
    %347 = vmatpush.msra.mxu0 %v252
    %348 = vmatpush.msra.mxu0 %v250
    %349 = vmatpush.msra.mxu0 %v248
    %350 = vmatpush.msra.mxu0 %v246
    %351 = vmatpush.msra.mxu0 %v244
    %352 = vmatpush.msra.mxu0 %v242
    %353 = vmatpush.msra.mxu0 %v240
    %354 = vmatmul.f32.gmra.mxu0 %v205
    %v355 = vpop.f32.mrf.mxu0
    %v356 = vadd.f32 %v336, %v355
    %357 = vdwg.mxu0
    %vm358 = vcmp.gt.f32.partialorder %v316, 0.0
    %vm359 = vcmp.gt.f32.partialorder %v356, 0.0
    %v360 = vmul.f32 %v316, 0.01
    %v361 = vmul.f32 %v356, 0.01
    %v362 = vsel %vm358, %v316, %v360
    %v363 = vsel %vm359, %v356, %v361
    %v364 = vld [vmem:[%s4] sm:$0xff]
    %v365 = vld [vmem:[%s4 + $0x8] sm:$0xff]
    %v366 = vld [vmem:[%s4 + $0x10] sm:$0xff]
    %v367 = vld [vmem:[%s4 + $0x18] sm:$0xff]
    %v368 = vld [vmem:[%s4 + $0x20] sm:$0xff]
    %v369 = vld [vmem:[%s4 + $0x28] sm:$0xff]
    %v370 = vld [vmem:[%s4 + $0x30] sm:$0xff]
    %v371 = vld [vmem:[%s4 + $0x38] sm:$0xff]
    %v372 = vld [vmem:[%s4 + $0x40] sm:$0xff]
    %v373 = vld [vmem:[%s4 + $0x48] sm:$0xff]
    %v374 = vld [vmem:[%s4 + $0x50] sm:$0xff]
    %v375 = vld [vmem:[%s4 + $0x58] sm:$0xff]
    %v376 = vld [vmem:[%s4 + $0x60] sm:$0xff]
    %v377 = vld [vmem:[%s4 + $0x68] sm:$0xff]
    %v378 = vld [vmem:[%s4 + $0x70] sm:$0xff]
    %v379 = vld [vmem:[%s4 + $0x78] sm:$0xff]
    %v380 = vld [vmem:[%s4 + $0x80] sm:$0xff]
    %v381 = vld [vmem:[%s4 + $0x88] sm:$0xff]
    %v382 = vld [vmem:[%s4 + $0x90] sm:$0xff]
    %v383 = vld [vmem:[%s4 + $0x98] sm:$0xff]
    %v384 = vld [vmem:[%s4 + $0xa0] sm:$0xff]
    %v385 = vld [vmem:[%s4 + $0xa8] sm:$0xff]
    %v386 = vld [vmem:[%s4 + $0xb0] sm:$0xff]
    %v387 = vld [vmem:[%s4 + $0xb8] sm:$0xff]
    %v388 = vld [vmem:[%s4 + $0xc0] sm:$0xff]
    %v389 = vld [vmem:[%s4 + $0xc8] sm:$0xff]
    %v390 = vld [vmem:[%s4 + $0xd0] sm:$0xff]
    %v391 = vld [vmem:[%s4 + $0xd8] sm:$0xff]
    %v392 = vld [vmem:[%s4 + $0xe0] sm:$0xff]
    %v393 = vld [vmem:[%s4 + $0xe8] sm:$0xff]
    %v394 = vld [vmem:[%s4 + $0xf0] sm:$0xff]
    %v395 = vld [vmem:[%s4 + $0xf8] sm:$0xff]
    %v396 = vld [vmem:[%s5] sm:$0x1]
    %v398 = vperm.slane %v396, 0
    %400 = vmatpush.msra.mxu0 %v379
    %401 = vmatpush.msra.mxu0 %v378
    %402 = vmatpush.msra.mxu0 %v377
    %403 = vmatpush.msra.mxu0 %v376
    %404 = vmatpush.msra.mxu0 %v375
    %405 = vmatpush.msra.mxu0 %v374
    %406 = vmatpush.msra.mxu0 %v373
    %407 = vmatpush.msra.mxu0 %v372
    %408 = vmatpush.msra.mxu0 %v371
    %409 = vmatpush.msra.mxu0 %v370
    %410 = vmatpush.msra.mxu0 %v369
    %411 = vmatpush.msra.mxu0 %v368
    %412 = vmatpush.msra.mxu0 %v367
    %413 = vmatpush.msra.mxu0 %v366
    %414 = vmatpush.msra.mxu0 %v365
    %415 = vmatpush.msra.mxu0 %v364
    %416 = vmatmul.f32.gmra.mxu0 %v362
    %v417 = vpop.f32.mrf.mxu0
    %v418 = vadd.f32 %v398, %v417
    %419 = vdwg.mxu0
    %420 = vmatpush.msra.mxu0 %v395
    %421 = vmatpush.msra.mxu0 %v394
    %422 = vmatpush.msra.mxu0 %v393
    %423 = vmatpush.msra.mxu0 %v392
    %424 = vmatpush.msra.mxu0 %v391
    %425 = vmatpush.msra.mxu0 %v390
    %426 = vmatpush.msra.mxu0 %v389
    %427 = vmatpush.msra.mxu0 %v388
    %428 = vmatpush.msra.mxu0 %v387
    %429 = vmatpush.msra.mxu0 %v386
    %430 = vmatpush.msra.mxu0 %v385
    %431 = vmatpush.msra.mxu0 %v384
    %432 = vmatpush.msra.mxu0 %v383
    %433 = vmatpush.msra.mxu0 %v382
    %434 = vmatpush.msra.mxu0 %v381
    %435 = vmatpush.msra.mxu0 %v380
    %436 = vmatmul.f32.gmra.mxu0 %v363
    %v437 = vpop.f32.mrf.mxu0
    %v438 = vadd.f32 %v418, %v437
    %439 = vdwg.mxu0
    %vm440 = vcmp.gt.f32.partialorder %v438, 0.0
    %v441 = vmul.f32 %v438, 0.01
    %v442 = vsel %vm440, %v438, %v441
    %vm443 = vcmask 64512
    %v444 = vsel %vm443, %v442, 0.0
    %445 = vadd.xlane.f32.xlu0 %v444
    %v446 = vpop.xlane.xlu0 %445
    %v447 = vld [vmem:[%s6] sm:$0x1]
    %v449 = vperm.slane %v447, 0
    %v451 = vmul.f32 %v446, %v449
    %v452 = vld [vmem:[%s1] sm:$0xff]
    %v453 = vld [vmem:[%s7] sm:$0xff]
    %v455 = vsel %vm443, %v452, 0
    %457 = vmatpush.msra.mxu0 0.0
    %458 = vmatpush.msra.mxu0 0.0
    %459 = vmatpush.msra.mxu0 0.0
    %460 = vmatpush.msra.mxu0 0.0
    %461 = vmatpush.msra.mxu0 0.0
    %462 = vmatpush.msra.mxu0 0.0
    %463 = vmatpush.msra.mxu0 0.0
    %464 = vmatpush.msra.mxu0 0.0
    %465 = vmatpush.msra.mxu0 0.0
    %466 = vmatpush.msra.mxu0 0.0
    %467 = vmatpush.msra.mxu0 0.0
    %468 = vmatpush.msra.mxu0 0.0
    %469 = vmatpush.msra.mxu0 0.0
    %470 = vmatpush.msra.mxu0 0.0
    %471 = vmatpush.msra.mxu0 0.0
    %472 = vmatpush.msra.mxu0 %v453
    %473 = vmatmul.f32.gmra.mxu0 %v455
    %v474 = vpop.f32.mrf.mxu0
    %v475 = vadd.f32 0.0, %v474
    %476 = vdwg.mxu0
    %v477 = vadd.f32 %v451, %v475
    %v478 = vld [vmem:[%s8] sm:$0x1]
    %v480 = vperm.slane %v478, 0
    %v482 = vadd.f32 %v477, %v480
    %vm483 = vcmask 31744
    %484 = vst.msk [vmem:[%s9] sm:$0xff] %vm483, %v482
    // Predicated region
    $region42: #{_lambda_.1} parent=1 // pred_check
      _
    $region43: #{_lambda_.1} parent=1 // pred_check_branch
      %486 = sbr.rel (0) target = $region45
    $region44: #{_lambda_.1} parent=1 // pred_region
      _
    $region45: #{_lambda_.1} parent=1 // pred_fallthru
      _
    // Predicated region
    $region46: #{_lambda_.1} parent=1 // pred_check
      _
    $region47: #{_lambda_.1} parent=1 // pred_check_branch
      %488 = sbr.rel (0) target = $region49
    $region48: #{_lambda_.1} parent=1 // pred_region
      _
    $region49: #{_lambda_.1} parent=1 // pred_fallthru
      _
    %489 = vsyncpa [#allocation3], 1

</llo_original>
